<compile_context>
chip_gen: v6e
topology: v6e:2x2x1
jax: 0.10.0
libtpu: 0.0.40
codegen_flags: <defaults>
</compile_context>

<pallas_src>
import functools
import math

import jax
import jax.numpy as jnp
from jax.experimental import pallas as pl
from jax.experimental.pallas import tpu as pltpu


VMEM_LIMIT = 48 * 1024 * 1024  # v7x-safe (64 MiB phys); raise to ~100 MiB on v5e/v6e


# ----------------------------------------------------------------------------
# Pallas kernels
# ----------------------------------------------------------------------------
def _patch_embed_kernel(patches_ref, w_ref, b_ref, pos_ref, out_ref):
    """Patch embedding (conv k=p, stride=p == matmul) + pos_embed add.

    patches_ref: (1, N, K) bf16   w_ref: (K, D) bf16
    b_ref: (1, D) f32             pos_ref: (1, N, D) f32
    out_ref: (1, N, D) f32
    """
    p = patches_ref[0]                                                 # (N, K) bf16
    y = jnp.dot(p, w_ref[...], preferred_element_type=jnp.float32)    # (N, D) f32
    y = y + b_ref[...] + pos_ref[0]
    out_ref[0] = y.astype(out_ref.dtype)


def _vit_layers_kernel(x_ref, ln1_g_ref, ln1_b_ref, qkv_w_ref, qkv_b_ref,
                       proj_w_ref, proj_b_ref, ln2_g_ref, ln2_b_ref,
                       fc1_w_ref, fc1_b_ref, fc2_w_ref, fc2_b_ref,
                       out_ref, tok_ref, *, num_heads, eps):
    """All transformer blocks fused.  grid = (B//Bt, depth); depth is 'arbitrary'.

    A block of Bt images lives flattened as (Bt*N, D) f32 in `tok_ref` (VMEM)
    across the layer axis; every layer's result is written (bf16) to out_ref so
    each layer's features can be extracted.  Weights arrive pre-cast to bf16
    (with the attention scale folded into q); matmuls accumulate in f32.
    """
    layer = pl.program_id(1)
    Bt, N, D = x_ref.shape
    H = num_heads
    dh = D // H

    @pl.when(layer == 0)
    def _():
        tok_ref[...] = x_ref[...].reshape(Bt * N, D).astype(jnp.float32)

    x = tok_ref[...]                                  # (Bt*N, D) f32 residual stream

    def layer_norm(v, g, b):                          # f32 statistics
        mu = jnp.mean(v, axis=-1, keepdims=True)
        var = jnp.mean((v - mu) ** 2, axis=-1, keepdims=True)
        return (v - mu) * jax.lax.rsqrt(var + eps) * g + b

    # ---- attention branch ----
    xn = layer_norm(x, ln1_g_ref[0], ln1_b_ref[0]).astype(jnp.bfloat16)   # (Bt*N, D)
    # single fused qkv matmul; attention scale is already folded into the q slice
    qkv = jnp.dot(xn, qkv_w_ref[0], preferred_element_type=jnp.float32) + qkv_b_ref[0]
    q3 = qkv[:, 0 * D:1 * D].reshape(Bt, N, D)
    k3 = qkv[:, 1 * D:2 * D].reshape(Bt, N, D)
    v3 = qkv[:, 2 * D:3 * D].reshape(Bt, N, D)

    def to_heads(t):  # (Bt, N, D) -> (Bt*H, N, dh) bf16, per-image head-major
        th = jnp.stack([t[:, :, h * dh:(h + 1) * dh] for h in range(H)], axis=1)
        return th.reshape(Bt * H, N, dh).astype(jnp.bfloat16)

    qh = to_heads(q3)
    kh = to_heads(k3)
    vh = to_heads(v3)

    # one batched MXU stream over (image, head) pairs; no per-head MXU calls
    s = jnp.einsum('bqd,bkd->bqk', qh, kh,
                   preferred_element_type=jnp.float32)                    # (Bt*H, N, N)
    s = s - jnp.max(s, axis=-1, keepdims=True)
    e = jnp.exp(s)
    p = e * pl.reciprocal(jnp.sum(e, axis=-1, keepdims=True), approx=True)
    o = jnp.einsum('bqk,bkd->bqd', p.astype(jnp.bfloat16), vh,
                   preferred_element_type=jnp.float32)                    # (Bt*H, N, dh)
    o4 = o.reshape(Bt, H, N, dh)
    att = jnp.concatenate([o4[:, h] for h in range(H)], axis=-1)          # (Bt, N, D)
    att = att.reshape(Bt * N, D)
    att = jnp.dot(att.astype(jnp.bfloat16), proj_w_ref[0],
                  preferred_element_type=jnp.float32) + proj_b_ref[0]
    x = x + att                                                           # f32 residual

    # ---- MLP branch ----
    xn2 = layer_norm(x, ln2_g_ref[0], ln2_b_ref[0]).astype(jnp.bfloat16)
    h1 = jnp.dot(xn2, fc1_w_ref[0], preferred_element_type=jnp.float32) + fc1_b_ref[0]
    # TODO(synk): timm ViT uses exact erf-GELU; tanh approximation (EUP-friendly) used here.
    h1 = 0.5 * h1 * (1.0 + jnp.tanh(0.7978845608028654 * (h1 + 0.044715 * h1 * h1 * h1)))
    h2 = jnp.dot(h1.astype(jnp.bfloat16), fc2_w_ref[0],
                 preferred_element_type=jnp.float32) + fc2_b_ref[0]
    y = x + h2                                                            # f32 residual

    tok_ref[...] = y
    out_ref[0] = y.reshape(Bt, N, D).astype(out_ref.dtype)                # bf16 writeback


# ----------------------------------------------------------------------------
# Wrappers around pallas_call
# ----------------------------------------------------------------------------
def patch_embed(patches, w, b, pos):
    B, N, K = patches.shape
    D = w.shape[1]
    return pl.pallas_call(
        _patch_embed_kernel,
        out_shape=jax.ShapeDtypeStruct((B, N, D), jnp.float32),
        grid=(B,),
        in_specs=[
            pl.BlockSpec((1, N, K), lambda i: (i, 0, 0)),
            pl.BlockSpec((K, D), lambda i: (0, 0)),
            pl.BlockSpec((1, D), lambda i: (0, 0)),
            pl.BlockSpec((1, N, D), lambda i: (0, 0, 0)),
        ],
        out_specs=pl.BlockSpec((1, N, D), lambda i: (i, 0, 0)),
        compiler_params=pltpu.CompilerParams(
            dimension_semantics=("parallel",),
            vmem_limit_bytes=VMEM_LIMIT),
    )(patches.astype(jnp.bfloat16), w.astype(jnp.bfloat16), b, pos)


def _pick_batch_block(B, max_block=8):
    """Largest divisor of B not exceeding max_block (weight-DMA amortization)."""
    bt = 1
    for d in range(1, min(B, max_block) + 1):
        if B % d == 0:
            bt = d
    return bt


def vit_layers(tokens, stacked, *, num_heads, eps=1e-6, batch_block=None,
               out_dtype=jnp.bfloat16):
    """All transformer blocks in one pallas_call; returns (depth, B, N, D) bf16."""
    B, N, D = tokens.shape
    depth = stacked["qkv_w"].shape[0]
    Hm = stacked["fc1_w"].shape[-1]
    Bt = batch_block if batch_block is not None else _pick_batch_block(B)
    assert B % Bt == 0, (B, Bt)
    kernel = functools.partial(_vit_layers_kernel, num_heads=num_heads, eps=eps)

    def wspec(shape):
        # one layer's worth of a stacked weight, indexed by the layer grid coord
        nd = len(shape)
        return pl.BlockSpec((1,) + shape[1:], lambda b, l, _nd=nd: (l,) + (0,) * (_nd - 1))

    in_specs = [
        pl.BlockSpec((Bt, N, D), lambda b, l: (b, 0, 0)),      # tokens (read at l==0)
        wspec((depth, 1, D)), wspec((depth, 1, D)),            # ln1 gamma, beta
        wspec((depth, D, 3 * D)), wspec((depth, 1, 3 * D)),    # fused qkv
        wspec((depth, D, D)), wspec((depth, 1, D)),            # attn proj
        wspec((depth, 1, D)), wspec((depth, 1, D)),            # ln2 gamma, beta
        wspec((depth, D, Hm)), wspec((depth, 1, Hm)),          # fc1
        wspec((depth, Hm, D)), wspec((depth, 1, D)),           # fc2
    ]
    return pl.pallas_call(
        kernel,
        out_shape=jax.ShapeDtypeStruct((depth, B, N, D), out_dtype),
        grid=(B // Bt, depth),
        in_specs=in_specs,
        out_specs=pl.BlockSpec((1, Bt, N, D), lambda b, l: (l, b, 0, 0)),
        scratch_shapes=[pltpu.VMEM((Bt * N, D), jnp.float32)],  # resident token stream
        compiler_params=pltpu.CompilerParams(
            dimension_semantics=("parallel", "arbitrary"),
            vmem_limit_bytes=VMEM_LIMIT),
    )(tokens, stacked["ln1_g"], stacked["ln1_b"], stacked["qkv_w"], stacked["qkv_b"],
      stacked["proj_w"], stacked["proj_b"], stacked["ln2_g"], stacked["ln2_b"],
      stacked["fc1_w"], stacked["fc1_b"], stacked["fc2_w"], stacked["fc2_b"])


# ----------------------------------------------------------------------------
# Model glue (parameter setup, patch extraction, feature rearrange)
# ----------------------------------------------------------------------------
def extract_patches(x, p):
    """NCHW -> (B, N, C*p*p) with the (C, p, p) flatten order matching conv weights."""
    B, C, H, W = x.shape
    x = x.reshape(B, C, H // p, p, W // p, p)
    x = x.transpose(0, 2, 4, 1, 3, 5)          # B, Hp, Wp, C, p, p
    return x.reshape(B, (H // p) * (W // p), C * p * p)


def init_params(key, *, in_chans, patch, embed_dim, depth, num_heads, mlp_ratio, num_patches):
    K = in_chans * patch * patch
    Hm = mlp_ratio * embed_dim
    ks = iter(jax.random.split(key, 4 + depth * 8))
    std = 0.02
    params = {
        "pe_w": jax.random.normal(next(ks), (K, embed_dim), jnp.float32) * std,
        "pe_b": jnp.zeros((1, embed_dim), jnp.float32),
        # pos_embed mimics timm layout (1, 1 + N, D); the CLS slot is dropped in forward.
        "pos": jax.random.normal(next(ks), (1, num_patches + 1, embed_dim), jnp.float32) * std,
        "blocks": [],
    }
    for _ in range(depth):
        blk = {
            "ln1_g": jnp.ones((1, embed_dim), jnp.float32),
            "ln1_b": jnp.zeros((1, embed_dim), jnp.float32),
            "qkv_w": jax.random.normal(next(ks), (embed_dim, 3 * embed_dim), jnp.float32) * std,
            "qkv_b": jax.random.normal(next(ks), (1, 3 * embed_dim), jnp.float32) * std,
            "proj_w": jax.random.normal(next(ks), (embed_dim, embed_dim), jnp.float32) * std,
            "proj_b": jax.random.normal(next(ks), (1, embed_dim), jnp.float32) * std,
            "ln2_g": jnp.ones((1, embed_dim), jnp.float32),
            "ln2_b": jnp.zeros((1, embed_dim), jnp.float32),
            "fc1_w": jax.random.normal(next(ks), (embed_dim, Hm), jnp.float32) * std,
            "fc1_b": jax.random.normal(next(ks), (1, Hm), jnp.float32) * std,
            "fc2_w": jax.random.normal(next(ks), (Hm, embed_dim), jnp.float32) * std,
            "fc2_b": jax.random.normal(next(ks), (1, embed_dim), jnp.float32) * std,
        }
        params["blocks"].append(blk)
    return params


def prepare_vit_params(params, *, num_heads):
    """One-time parameter prep, hoisted out of the forward path:
    stack per-layer params on a leading layer axis, cast MXU weights to bf16,
    and fold the 1/sqrt(dh) attention scale into the q slice of qkv w/b."""
    blocks = params["blocks"]
    D = blocks[0]["qkv_w"].shape[0]
    dh = D // num_heads
    scale = dh ** -0.5

    def stack(name):
        return jnp.stack([b[name] for b in blocks], axis=0)

    qkv_w = stack("qkv_w")                           # (L, D, 3D)
    qkv_b = stack("qkv_b")                           # (L, 1, 3D)
    qkv_w = qkv_w.at[:, :, :D].multiply(scale)       # fold attention scale into q
    qkv_b = qkv_b.at[:, :, :D].multiply(scale)

    stacked = {
        "ln1_g": stack("ln1_g"), "ln1_b": stack("ln1_b"),
        "qkv_w": qkv_w.astype(jnp.bfloat16), "qkv_b": qkv_b,
        "proj_w": stack("proj_w").astype(jnp.bfloat16), "proj_b": stack("proj_b"),
        "ln2_g": stack("ln2_g"), "ln2_b": stack("ln2_b"),
        "fc1_w": stack("fc1_w").astype(jnp.bfloat16), "fc1_b": stack("fc1_b"),
        "fc2_w": stack("fc2_w").astype(jnp.bfloat16), "fc2_b": stack("fc2_b"),
    }
    return {
        "pe_w": params["pe_w"].astype(jnp.bfloat16),
        "pe_b": params["pe_b"],
        "pos": params["pos"],
        "blocks": stacked,
    }


def vit_backbone_forward(x, prepared, *, patch, num_heads, layers_to_extract=None,
                         batch_block=None):
    depth = prepared["blocks"]["qkv_w"].shape[0]
    if layers_to_extract is None:
        layers_to_extract = list(range(depth))
    patches = extract_patches(x, patch)                         # (B, N, K)
    pos = prepared["pos"][:, 1:, :]                             # drop CLS slot (matches ref)
    tokens = patch_embed(patches, prepared["pe_w"], prepared["pe_b"], pos)
    # pos_drop is Dropout -> identity at inference.
    feats_all = vit_layers(tokens, prepared["blocks"], num_heads=num_heads,
                           batch_block=batch_block)             # (depth, B, N, D) bf16
    # 'b (h w) c -> b c h w'
    out = []
    for i in layers_to_extract:
        f = feats_all[i]
        B, N, D = f.shape
        P = int(math.isqrt(N))
        out.append(f.reshape(B, P, P, D).transpose(0, 3, 1, 2).astype(jnp.float32))
    return out


# ----------------------------------------------------------------------------
# Main
# ----------------------------------------------------------------------------
if __name__ == "__main__":
    B, C, H, W = 2, 4, 16, 16
    patch = 4
    embed_dim = 32
    depth = 2
    num_heads = 4
    mlp_ratio = 4
    num_patches = (H // patch) * (W // patch)   # 16

    key = jax.random.PRNGKey(0)
    k_x, k_p = jax.random.split(key)
    x = jax.random.normal(k_x, (B, C, H, W), jnp.float32)
    params = init_params(k_p, in_chans=C, patch=patch, embed_dim=embed_dim,
                         depth=depth, num_heads=num_heads, mlp_ratio=mlp_ratio,
                         num_patches=num_patches)
    prepared = prepare_vit_params(params, num_heads=num_heads)   # one-time weight prep

    feats = vit_backbone_forward(x, prepared, patch=patch, num_heads=num_heads)
    feats = jax.block_until_ready(feats)

    P = int(math.isqrt(num_patches))
    assert len(feats) == depth
    for f in feats:
        assert f.shape == (B, embed_dim, P, P), f.shape
        assert bool(jnp.all(jnp.isfinite(f)))
    print("KERNEL_OK")
</pallas_src>

<mosaic_0001>
module attributes {stable_mosaic.version = 11 : i64} {
  func.func @_patch_embed_kernel(%arg0: i32, %arg1: memref<1x16x64xbf16, #tpu.memory_space<vmem>>, %arg2: memref<64x32xbf16, #tpu.memory_space<vmem>>, %arg3: memref<1x32xf32, #tpu.memory_space<vmem>>, %arg4: memref<1x16x32xf32, #tpu.memory_space<vmem>>, %arg5: memref<1x16x32xf32, #tpu.memory_space<vmem>>) attributes {dimension_semantics = [#tpu.dimension_semantics<parallel>], iteration_bounds = array<i64: 2>, scalar_prefetch = 0 : i64, scratch_operands = 0 : i64, tpu.core_type = #tpu.core_type<tc>, window_params = [{transform_indices = @transform_0, window_bounds = array<i64: 1, 16, 64>}, {pipeline_mode = #tpu.pipeline_mode<synchronous>, transform_indices = @transform_1, window_bounds = array<i64: 64, 32>}, {pipeline_mode = #tpu.pipeline_mode<synchronous>, transform_indices = @transform_2, window_bounds = array<i64: 1, 32>}, {pipeline_mode = #tpu.pipeline_mode<synchronous>, transform_indices = @transform_3, window_bounds = array<i64: 1, 16, 32>}, {transform_indices = @transform_4, window_bounds = array<i64: 1, 16, 32>}]} {
    %c0 = arith.constant 0 : index
    %c0_0 = arith.constant 0 : index
    %c0_1 = arith.constant 0 : index
    %0 = vector.load %arg1[%c0, %c0_0, %c0_1] : memref<1x16x64xbf16, #tpu.memory_space<vmem>>, vector<1x16x64xbf16>
    %1 = vector.shape_cast %0 : vector<1x16x64xbf16> to vector<16x64xbf16>
    %c0_2 = arith.constant 0 : index
    %c0_3 = arith.constant 0 : index
    %2 = vector.load %arg2[%c0_2, %c0_3] : memref<64x32xbf16, #tpu.memory_space<vmem>>, vector<64x32xbf16>
    %cst = arith.constant dense<0.000000e+00> : vector<16x32xf32>
    %3 = tpu.matmul %1, %2, %cst {dimension_numbers = #tpu.dot_dimension_numbers<[1], [0], [0], [1], [0, 0, 1, 1], [], []>} : vector<16x64xbf16>, vector<64x32xbf16>, vector<16x32xf32> -> vector<16x32xf32>
    %c0_4 = arith.constant 0 : index
    %c0_5 = arith.constant 0 : index
    %4 = vector.load %arg3[%c0_4, %c0_5] : memref<1x32xf32, #tpu.memory_space<vmem>>, vector<1x32xf32>
    %5 = vector.broadcast %4 : vector<1x32xf32> to vector<16x32xf32>
    %6 = arith.addf %3, %5 : vector<16x32xf32>
    %c0_6 = arith.constant 0 : index
    %c0_7 = arith.constant 0 : index
    %c0_8 = arith.constant 0 : index
    %7 = vector.load %arg4[%c0_6, %c0_7, %c0_8] : memref<1x16x32xf32, #tpu.memory_space<vmem>>, vector<1x16x32xf32>
    %8 = vector.shape_cast %7 : vector<1x16x32xf32> to vector<16x32xf32>
    %9 = arith.addf %6, %8 : vector<16x32xf32>
    %c0_9 = arith.constant 0 : index
    %c0_10 = arith.constant 0 : index
    %c0_11 = arith.constant 0 : index
    %10 = vector.load %arg5[%c0_9, %c0_10, %c0_11] : memref<1x16x32xf32, #tpu.memory_space<vmem>>, vector<1x16x32xf32>
    %11 = vector.shape_cast %10 : vector<1x16x32xf32> to vector<16x32xf32>
    %12 = vector.shape_cast %9 : vector<16x32xf32> to vector<1x16x32xf32>
    tpu.vector_store %arg5[%c0_9, %c0_10, %c0_11], %12 {strides = array<i32>} : memref<1x16x32xf32, #tpu.memory_space<vmem>>, vector<1x16x32xf32>,
    return
  }
  func.func @transform_0(%arg0: i32) -> (i32, i32, i32) {
    %c0_i32 = arith.constant 0 : i32
    %c0_i32_0 = arith.constant 0 : i32
    %c0_i32_1 = arith.constant 0 : i32
    return %arg0, %c0_i32, %c0_i32_0 : i32, i32, i32
  }
  func.func @transform_1(%arg0: i32) -> (i32, i32) {
    %c0_i32 = arith.constant 0 : i32
    %c0_i32_0 = arith.constant 0 : i32
    %c0_i32_1 = arith.constant 0 : i32
    return %c0_i32, %c0_i32_0 : i32, i32
  }
  func.func @transform_2(%arg0: i32) -> (i32, i32) {
    %c0_i32 = arith.constant 0 : i32
    %c0_i32_0 = arith.constant 0 : i32
    %c0_i32_1 = arith.constant 0 : i32
    return %c0_i32, %c0_i32_0 : i32, i32
  }
  func.func @transform_3(%arg0: i32) -> (i32, i32, i32) {
    %c0_i32 = arith.constant 0 : i32
    %c0_i32_0 = arith.constant 0 : i32
    %c0_i32_1 = arith.constant 0 : i32
    %c0_i32_2 = arith.constant 0 : i32
    return %c0_i32, %c0_i32_0, %c0_i32_1 : i32, i32, i32
  }
  func.func @transform_4(%arg0: i32) -> (i32, i32, i32) {
    %c0_i32 = arith.constant 0 : i32
    %c0_i32_0 = arith.constant 0 : i32
    %c0_i32_1 = arith.constant 0 : i32
    return %arg0, %c0_i32, %c0_i32_0 : i32, i32, i32
  }
}

</mosaic_0001>

<llo_original>
// kernel: tpu_custom_call.1
$region0: #{tpu_custom_call.1}
  #allocation0 [shape = 'u32[]', space=smem, size = 0x4, offset = 0x4, fixed_abs, tag = 'smem constant byte address 0x4 - core index']
  #allocation1 [shape = 'u32[144,128]{1,0:T(1,128)}', space=vmem, size = 0x12000, scoped, tag = 'internal scratch']
  %s0 = inlined_call_operand.vmem [shape: bf16[2,16,64], index: 0, kind: input, shape index: {}]
  %s1 = inlined_call_operand.vmem [shape: bf16[64,32], index: 1, kind: input, shape index: {}]
  %s2 = inlined_call_operand.vmem [shape: f32[1,32], index: 2, kind: input, shape index: {}]
  %s3 = inlined_call_operand.vmem [shape: f32[1,16,32], index: 3, kind: input, shape index: {}]
  %s4 = inlined_call_operand.hbm [shape: f32[2,16,32], index: 4, kind: output, shape index: {}]
  %s5 = sld [smem:[#allocation0]]
  $region49: #{tpu_custom_call.1} parent=0
    _
  %s7 = ssub.s32 1, %s5
  %s8 = scalar_select 0, %s7, %s5
  $region1: #{tpu_custom_call.1} parent=0
    #allocation2 [shape = 'u8[16384]{0}', space=vmem, size = 0x4000, scoped, tag = 'output window, operand 0']
    #allocation3 [shape = 's32[2]{0}', space=sflag, size = 0x8, scoped, tag = 'scoped memory for tpu_custom_call.1']
    %9 = vsyncpa [#allocation3], 0
    %s10 = scalar_lea.sflag [#allocation3], 1
    %11 = vsyncpa %s10, 0
    loop: start=0, step=1, limit=4
    $region2: #{tpu_custom_call.1} parent=1 // loop_pre_header
      _
    $region3: #{tpu_custom_call.1} parent=1 // loop_header
      %s13 = sphi 0, %s17
      %p14 = scmp.ge.s32.totalorder %s13, 4
      %s23 = sphi 0, %s25
      %s26 = sphi 0, %s23
      %s27 = sphi 0, %s26
      %s43 = sphi 0, %s27
      %s47 = sphi 0, %s47
      %s49 = sphi 0, %s47
      %s50 = sphi 0, %s49
      %s64 = sphi 0, %s50
      %s68 = sphi 0, %s68
      %s70 = sphi 0, %s68
      %s71 = sphi 0, %s70
      %s85 = sphi 0, %s71
      %s89 = sphi 0, %s89
      %s91 = sphi 0, %s89
      %s92 = sphi 0, %s91
      %s106 = sphi 0, %s92
      %s112 = sphi 0, %s114
      %s115 = sphi 0, %s112
      %s116 = sphi 0, %s115
      %s132 = sphi 0, %s116
    $region4: #{tpu_custom_call.1} parent=1 // loop_header_branch
      %16 = sbr.rel (%p14) target = $region8
    $region5: #{tpu_custom_call.1} parent=1 // loop_body
      %s18 = ssub.s32 %s13, 1
      %s19 = ssub.s32 %s13, 2
      %s20 = sadd.s32 %s13, 1
      %s21 = ssub.s32 %s13, %s20
      %p22 = scmp.eq.s32.totalorder %s21, 0
      %s24 = sadd.s32 %s23, 1
      %s25 = scalar_select %p22, %s23, %s24
      %p28 = pneg %p22
      %p29 = scmp.eq.s32.totalorder %s13, 1
      %p30 = por %p28, %p29
      %p31 = scmp.ne.s32.totalorder %s23, %s26
      %p32 = scmp.eq.s32.totalorder %s13, 0
      %p33 = por %p31, %p32
      %p34 = scmp.ne.s32.totalorder %s23, %s26
      %p35 = scmp.eq.s32.totalorder %s18, 1
      %p36 = por %p34, %p35
      %p37 = scmp.ne.s32.totalorder %s26, %s27
      %p38 = scmp.eq.s32.totalorder %s18, 0
      %p39 = por %p37, %p38
      %p40 = scmp.ne.s32.totalorder %s26, %s27
      %p41 = scmp.eq.s32.totalorder %s19, 1
      %p42 = por %p40, %p41
      %p44 = scmp.ne.s32.totalorder %s27, %s43
      %p45 = scmp.eq.s32.totalorder %s19, 0
      %p46 = por %p44, %p45
      %s48 = sadd.s32 %s47, 1
      %p51 = scmp.eq.s32.totalorder %s13, 1
      %p52 = scmp.ne.s32.totalorder %s47, %s49
      %p53 = scmp.eq.s32.totalorder %s13, 0
      %p54 = por %p52, %p53
      %p55 = scmp.ne.s32.totalorder %s47, %s49
      %p56 = scmp.eq.s32.totalorder %s18, 1
      %p57 = por %p55, %p56
      %p58 = scmp.ne.s32.totalorder %s49, %s50
      %p59 = scmp.eq.s32.totalorder %s18, 0
      %p60 = por %p58, %p59
      %p61 = scmp.ne.s32.totalorder %s49, %s50
      %p62 = scmp.eq.s32.totalorder %s19, 1
      %p63 = por %p61, %p62
      %p65 = scmp.ne.s32.totalorder %s50, %s64
      %p66 = scmp.eq.s32.totalorder %s19, 0
      %p67 = por %p65, %p66
      %s69 = sadd.s32 %s68, 1
      %p72 = scmp.eq.s32.totalorder %s13, 1
      %p73 = scmp.ne.s32.totalorder %s68, %s70
      %p74 = scmp.eq.s32.totalorder %s13, 0
      %p75 = por %p73, %p74
      %p76 = scmp.ne.s32.totalorder %s68, %s70
      %p77 = scmp.eq.s32.totalorder %s18, 1
      %p78 = por %p76, %p77
      %p79 = scmp.ne.s32.totalorder %s70, %s71
      %p80 = scmp.eq.s32.totalorder %s18, 0
      %p81 = por %p79, %p80
      %p82 = scmp.ne.s32.totalorder %s70, %s71
      %p83 = scmp.eq.s32.totalorder %s19, 1
      %p84 = por %p82, %p83
      %p86 = scmp.ne.s32.totalorder %s71, %s85
      %p87 = scmp.eq.s32.totalorder %s19, 0
      %p88 = por %p86, %p87
      %s90 = sadd.s32 %s89, 1
      %p93 = scmp.eq.s32.totalorder %s13, 1
      %p94 = scmp.ne.s32.totalorder %s89, %s91
      %p95 = scmp.eq.s32.totalorder %s13, 0
      %p96 = por %p94, %p95
      %p97 = scmp.ne.s32.totalorder %s89, %s91
      %p98 = scmp.eq.s32.totalorder %s18, 1
      %p99 = por %p97, %p98
      %p100 = scmp.ne.s32.totalorder %s91, %s92
      %p101 = scmp.eq.s32.totalorder %s18, 0
      %p102 = por %p100, %p101
      %p103 = scmp.ne.s32.totalorder %s91, %s92
      %p104 = scmp.eq.s32.totalorder %s19, 1
      %p105 = por %p103, %p104
      %p107 = scmp.ne.s32.totalorder %s92, %s106
      %p108 = scmp.eq.s32.totalorder %s19, 0
      %p109 = por %p107, %p108
      %s110 = ssub.s32 %s13, %s20
      %p111 = scmp.eq.s32.totalorder %s110, 0
      %s113 = sadd.s32 %s112, 1
      %s114 = scalar_select %p111, %s112, %s113
      %p117 = pneg %p111
      %p118 = scmp.eq.s32.totalorder %s13, 1
      %p119 = por %p117, %p118
      %p120 = scmp.ne.s32.totalorder %s112, %s115
      %p121 = scmp.eq.s32.totalorder %s13, 0
      %p122 = por %p120, %p121
      %p123 = scmp.ne.s32.totalorder %s112, %s115
      %p124 = scmp.eq.s32.totalorder %s18, 1
      %p125 = por %p123, %p124
      %p126 = scmp.ne.s32.totalorder %s115, %s116
      %p127 = scmp.eq.s32.totalorder %s18, 0
      %p128 = por %p126, %p127
      %p129 = scmp.ne.s32.totalorder %s115, %s116
      %p130 = scmp.eq.s32.totalorder %s19, 1
      %p131 = por %p129, %p130
      %p133 = scmp.ne.s32.totalorder %s116, %s132
      %p134 = scmp.eq.s32.totalorder %s19, 0
      %p135 = por %p133, %p134
      %p136 = scmp.le.s32.totalorder 1, %s13
      %p137 = scmp.lt.s32.totalorder %s13, 3
      %p138 = pnand %p136, %p137
      %p139 = pneg %p138
      // Predicated region
      $region9: #{tpu_custom_call.1} parent=5 // pred_check
        _
      $region10: #{tpu_custom_call.1} parent=5 // pred_check_branch
        %141 = sbr.rel (%p138) target = $region12
      $region11: #{tpu_custom_call.1} parent=5 // pred_region
        %s142 = ssub.s32 %s13, 1
        // Predicated region
        $region13: #{tpu_custom_call.1} parent=11 // pred_check
          %p143 = pneg %p60
        $region14: #{tpu_custom_call.1} parent=11 // pred_check_branch
          %145 = sbr.rel (%p143) target = $region16
        $region15: #{tpu_custom_call.1} parent=11 // pred_region
          _
        $region16: #{tpu_custom_call.1} parent=11 // pred_fallthru
          _
        // Predicated region
        $region17: #{tpu_custom_call.1} parent=11 // pred_check
          %p146 = pneg %p81
        $region18: #{tpu_custom_call.1} parent=11 // pred_check_branch
          %148 = sbr.rel (%p146) target = $region20
        $region19: #{tpu_custom_call.1} parent=11 // pred_region
          _
        $region20: #{tpu_custom_call.1} parent=11 // pred_fallthru
          _
        // Predicated region
        $region21: #{tpu_custom_call.1} parent=11 // pred_check
          %p149 = pneg %p102
        $region22: #{tpu_custom_call.1} parent=11 // pred_check_branch
          %151 = sbr.rel (%p149) target = $region24
        $region23: #{tpu_custom_call.1} parent=11 // pred_region
          _
        $region24: #{tpu_custom_call.1} parent=11 // pred_fallthru
          _
      $region12: #{tpu_custom_call.1} parent=5 // pred_fallthru
        _
      %p152 = scmp.lt.s32.totalorder %s13, 2
      // Predicated region
      $region25: #{tpu_custom_call.1} parent=5 // pred_check
        %p153 = pneg %p152
      $region26: #{tpu_custom_call.1} parent=5 // pred_check_branch
        %155 = sbr.rel (%p153) target = $region28
      $region27: #{tpu_custom_call.1} parent=5 // pred_region
        // Predicated region
        $region29: #{tpu_custom_call.1} parent=27 // pred_check
          %p156 = pneg %p33
        $region30: #{tpu_custom_call.1} parent=27 // pred_check_branch
          %158 = sbr.rel (%p156) target = $region32
        $region31: #{tpu_custom_call.1} parent=27 // pred_region
          %p159 = scmp.lt.s32.totalorder %s13, 1
          %s160 = scalar_select %p159, %s13, 1
          %s161 = smul.addr %s160, 2
          %s162 = smul.addr %s161, 4
          %s163 = scalar_lea.vmem %s0, %s162
        $region32: #{tpu_custom_call.1} parent=27 // pred_fallthru
          _
      $region28: #{tpu_custom_call.1} parent=5 // pred_fallthru
        _
      %p164 = scmp.le.s32.totalorder 1, %s13
      %p165 = scmp.lt.s32.totalorder %s13, 3
      %p166 = pnand %p164, %p165
      %p167 = pneg %p166
      // Predicated region
      $region33: #{tpu_custom_call.1} parent=5 // pred_check
        _
      $region34: #{tpu_custom_call.1} parent=5 // pred_check_branch
        %169 = sbr.rel (%p166) target = $region36
      $region35: #{tpu_custom_call.1} parent=5 // pred_region
        %s170 = ssub.s32 %s13, 1
        %p171 = scmp.lt.s32.totalorder %s18, 1
        %s172 = scalar_select %p171, %s18, 1
        %s173 = smul.addr %s172, 2
        %s174 = smul.addr %s173, 4
        %s175 = scalar_lea.vmem %s0, %s174
        %p176 = pneg %p39
        %p177 = pneg %p36
        %p178 = pneg %p60
        %p179 = pneg %p57
        %p180 = pneg %p81
        %p181 = pneg %p78
        %p182 = pneg %p102
        %p183 = pneg %p99
        %p184 = pneg %p128
        %p185 = pneg %p125
        %s186 = sand.u32 %s115, 1
        %s187 = scalar_lea.sflag [#allocation3], %s186
        %s188 = sand.u32 %s115, 1
        %s189 = smul.addr %s188, 16
        %s190 = scalar_lea.vmem [#allocation2], %s189
        %p191 = scmp.lt.s32.totalorder %s18, 1
        %s192 = scalar_select %p191, %s18, 1
        %s193 = smul.addr %s192, 2
        %s194 = smul.addr %s193, 4
        %s195 = scalar_lea.vmem %s0, %s194
        %v197 = vld [vmem:[%s195] sm:$0xf]
        %v198 = vld [vmem:[%s195 + $0x4] sm:$0xf]
        %v199 = vld [vmem:[%s1] sm:$0xf]
        %v200 = vld [vmem:[%s1 + $0x4] sm:$0xf]
        %v201 = vld [vmem:[%s1 + $0x8] sm:$0xf]
        %v202 = vld [vmem:[%s1 + $0xc] sm:$0xf]
        %v203 = vld [vmem:[%s1 + $0x10] sm:$0xf]
        %v204 = vld [vmem:[%s1 + $0x14] sm:$0xf]
        %v205 = vld [vmem:[%s1 + $0x18] sm:$0xf]
        %v206 = vld [vmem:[%s1 + $0x1c] sm:$0xf]
        %v207 = vld [vmem:[%s2] sm:$0x1]
        %v209 = vlaneseq
        %v210 = vshrl.u32 %v209, 7
        %v211 = vsub.s32 0, %v210
        %v212 = vrot.slane %v207, %v211
        %v216 = vunpack.c.l.b16 %v197
        %v217 = vunpack.c.l.b16 %v198
        %v218 = vpack.c.b16 %v217, %v216
        %v227 = vunpack.c.l.b16 %v199
        %v228 = vunpack.c.l.b16 %v200
        %v229 = vunpack.c.l.b16 %v201
        %v230 = vunpack.c.l.b16 %v202
        %v231 = vunpack.c.l.b16 %v203
        %v232 = vunpack.c.l.b16 %v204
        %v233 = vunpack.c.l.b16 %v205
        %v234 = vunpack.c.l.b16 %v206
        %v235 = vpack.c.b16 %v228, %v227
        %v236 = vpack.c.b16 %v230, %v229
        %v237 = vpack.c.b16 %v232, %v231
        %v238 = vpack.c.b16 %v234, %v233
        %vm243 = vcmask 523264
        %v245 = vsel %vm243, %v218, 0
        %247 = vmatprep.subr.bf16.mxu0 0
        %248 = vmatpush1.bf16.msra.mxu0 0
        %249 = vmatprep.subr.bf16.mxu0 0
        %250 = vmatpush1.bf16.msra.mxu0 0
        %251 = vmatprep.subr.bf16.mxu0 0
        %252 = vmatpush1.bf16.msra.mxu0 0
        %253 = vmatprep.subr.bf16.mxu0 0
        %254 = vmatpush1.bf16.msra.mxu0 0
        %255 = vmatprep.subr.bf16.mxu0 0
        %256 = vmatpush1.bf16.msra.mxu0 %v238
        %257 = vmatprep.subr.bf16.mxu0 0
        %258 = vmatpush1.bf16.msra.mxu0 %v237
        %259 = vmatprep.subr.bf16.mxu0 0
        %260 = vmatpush1.bf16.msra.mxu0 %v236
        %261 = vmatprep.subr.bf16.mxu0 0
        %262 = vmatpush1.bf16.msra.mxu0 %v235
        %263 = vmatprep.subr.bf16.mxu0 0
        %264 = vmatpush2.bf16.msra.mxu0 0
        %265 = vmatprep.subr.bf16.mxu0 0
        %266 = vmatpush2.bf16.msra.mxu0 0
        %267 = vmatprep.subr.bf16.mxu0 0
        %268 = vmatpush2.bf16.msra.mxu0 0
        %269 = vmatprep.subr.bf16.mxu0 0
        %270 = vmatpush2.bf16.msra.mxu0 0
        %271 = vmatprep.subr.bf16.mxu0 0
        %272 = vmatpush2.bf16.msra.mxu0 0
        %273 = vmatprep.subr.bf16.mxu0 0
        %274 = vmatpush2.bf16.msra.mxu0 0
        %275 = vmatprep.subr.bf16.mxu0 0
        %276 = vmatpush2.bf16.msra.mxu0 0
        %277 = vmatprep.subr.bf16.mxu0 0
        %278 = vmatpush2.bf16.msra.mxu0 0
        %279 = vmatprep.mubr.bf16.mxu0 0
        %280 = vmatmul.mubr.bf16.gmra.mxu0 %v245
        %v281 = vpop.f32.mrf.mxu0
        %v282 = vadd.f32 %v212, %v281
        %v283 = vpop.f32.mrf.mxu0
        %v284 = vpop.f32.mrf.mxu0
        %v285 = vadd.f32 %v212, %v284
        %v286 = vpop.f32.mrf.mxu0
        %287 = vdwg.mxu0
        %v288 = vld [vmem:[%s3] sm:$0xff]
        %v289 = vld [vmem:[%s3 + $0x8] sm:$0xff]
        %v290 = vadd.f32 %v282, %v288
        %v291 = vadd.f32 %v285, %v289
        %vm292 = vcmask 261120
        %293 = vst.msk [vmem:[%s190] sm:$0xff] %vm292, %v290
        %294 = vst.msk [vmem:[%s190 + $0x8] sm:$0xff] %vm292, %v291
        %s295 = sand.u32 %s115, 1
        %s296 = scalar_lea.sflag [#allocation3], %s295
        %s297 = sand.u32 %s115, 1
        %s298 = smul.addr %s297, 16
        %s299 = scalar_lea.vmem [#allocation2], %s298
        // Predicated region
        $region37: #{tpu_custom_call.1} parent=35 // pred_check
          %p300 = pneg %p125
        $region38: #{tpu_custom_call.1} parent=35 // pred_check_branch
          %302 = sbr.rel (%p300) target = $region40
        $region39: #{tpu_custom_call.1} parent=35 // pred_region
          %s304 = ssub.s32 256, 256
          %305 = vsyncadd %s296, %s304
          %s306 = smul.addr %s18, 2
          %s307 = smul.addr %s306, 128
          %s308 = scalar_lea.hbm %s4, %s307
          %s309 = sshll.u32 %s299, 4
          %s310 = int_to_ptr.vmem [resolvable:$true] %s309
          %315 = dma.vmem_to_hbm [thread:$0]  %s310, 256, %s308, %s296, 128, 128, 8
        $region40: #{tpu_custom_call.1} parent=35 // pred_fallthru
          _
      $region36: #{tpu_custom_call.1} parent=5 // pred_fallthru
        _
      %p316 = scmp.le.s32.totalorder 2, %s13
      // Predicated region
      $region41: #{tpu_custom_call.1} parent=5 // pred_check
        %p317 = pneg %p316
      $region42: #{tpu_custom_call.1} parent=5 // pred_check_branch
        %319 = sbr.rel (%p317) target = $region44
      $region43: #{tpu_custom_call.1} parent=5 // pred_region
        %s320 = ssub.s32 %s13, 2
        // Predicated region
        $region45: #{tpu_custom_call.1} parent=43 // pred_check
          %p321 = pneg %p131
        $region46: #{tpu_custom_call.1} parent=43 // pred_check_branch
          %323 = sbr.rel (%p321) target = $region48
        $region47: #{tpu_custom_call.1} parent=43 // pred_region
          %s324 = sand.u32 %s116, 1
          %s325 = scalar_lea.sflag [#allocation3], %s324
          %s326 = sand.u32 %s116, 1
          %s327 = smul.addr %s326, 16
          %s328 = scalar_lea.vmem [#allocation2], %s327
          %329 = dma.done %s325, 256
        $region48: #{tpu_custom_call.1} parent=43 // pred_fallthru
          _
      $region44: #{tpu_custom_call.1} parent=5 // pred_fallthru
        _
    $region6: #{tpu_custom_call.1} parent=1 // loop_footer
      %s17 = sadd.s32 1, %s13
    $region7: #{tpu_custom_call.1} parent=1 // loop_footer_branch
      %12 = sbr.rel target = $region3
    $region8: #{tpu_custom_call.1} parent=1 // loop_exit
      _
    %330 = vsyncpa [#allocation3], 1
    %s331 = scalar_lea.sflag [#allocation3], 1
    %332 = vsyncpa %s331, 1

</llo_original>
